<compile_context>
chip_gen: v5e
topology: v5e:2x2
jax: 0.10.0
libtpu: 0.0.40
codegen_flags: <defaults>
</compile_context>

<pallas_src>
import math
import functools

import jax
import jax.numpy as jnp
from jax.experimental import pallas as pl
from jax.experimental.pallas import tpu as pltpu


_VMEM_LIMIT = 32 * 1024 * 1024  # explicit scoped-VMEM budget (safe on v5e/v6e/v7x)


# --------------------------- shared math helpers -----------------------------

def _layernorm(x, g, b, eps=1e-5):
    """f32 LayerNorm over the last axis (matches torch LayerNorm, fp32 math)."""
    x = x.astype(jnp.float32)
    mu = jnp.mean(x, axis=-1, keepdims=True)
    var = jnp.mean((x - mu) ** 2, axis=-1, keepdims=True)
    return (x - mu) * jax.lax.rsqrt(var + eps) * g + b


def _mm(a, w):
    """bf16 operands, f32 accumulation (mixed-precision policy of the kernels)."""
    return jnp.dot(a.astype(jnp.bfloat16), w.astype(jnp.bfloat16),
                   preferred_element_type=jnp.float32)


# ------------------------- tiling-size helper functions ----------------------

def _row_tile(m, target=256):
    """Largest divisor of m that is a multiple of 8 and <= target (else full m)."""
    best = m
    for cand in range(8, min(m, target) + 1, 8):
        if m % cand == 0:
            best = cand
    return best


def _batch_tile(n, l, target_rows=256):
    """Largest divisor of n such that tb*l stays <= max(target_rows, l)."""
    tb = 1
    for cand in range(1, n + 1):
        if n % cand == 0 and cand * l <= max(target_rows, l):
            tb = cand
    return tb


# ---------------------- ResidualAttentionBlock kernel ------------------------

def resblock_kernel(x_ref,
                    ln1g_ref, ln1b_ref,
                    w_in_ref, b_in_ref, w_out_ref, b_out_ref,
                    ln2g_ref, ln2b_ref,
                    w_fc_ref, b_fc_ref, w_proj_ref, b_proj_ref,
                    o_ref,
                    attn_scratch,
                    *, n_head):
    """One ResidualAttentionBlock for a (TB, L, D) batch tile."""
    TB, L, D = x_ref.shape
    M = TB * L
    dh = D // n_head
    scale = 1.0 / math.sqrt(dh)

    x = x_ref[...].astype(jnp.float32).reshape(M, D)

    # ---------------- attention branch (nn.MultiheadAttention) ----------------
    y = _layernorm(x, ln1g_ref[...], ln1b_ref[...])
    y_bf = y.astype(jnp.bfloat16)
    # packed in-projection: (M, D) @ (D, 3D) + bias  -> best MXU fill (N = 3D)
    qkv = jnp.dot(y_bf, w_in_ref[...], preferred_element_type=jnp.float32) + b_in_ref[...]
    q = qkv[:, :D].reshape(TB, L, D)            # 128-aligned column slices
    k = qkv[:, D:2 * D].reshape(TB, L, D)
    v = qkv[:, 2 * D:].reshape(TB, L, D)

    # Heads unrolled statically; each head is a single TB-batched contraction
    # (Mosaic dot_general supports one leading batch dim).  Head outputs go
    # straight into the f32 VMEM scratch -- no concatenate, no long live ranges.
    for h in range(n_head):
        sl = slice(h * dh, (h + 1) * dh)
        qh = q[:, :, sl].astype(jnp.bfloat16)
        kh = k[:, :, sl].astype(jnp.bfloat16)
        vh = v[:, :, sl].astype(jnp.bfloat16)
        s = jnp.einsum('bqd,bkd->bqk', qh, kh,
                       preferred_element_type=jnp.float32) * scale
        s = s - jnp.max(s, axis=-1, keepdims=True)
        prob = jnp.exp(s)
        inv = pl.reciprocal(jnp.sum(prob, axis=-1, keepdims=True), approx=True)
        prob = (prob * inv).astype(jnp.bfloat16)
        oh = jnp.einsum('bqk,bkd->bqd', prob, vh,
                        preferred_element_type=jnp.float32)
        attn_scratch[:, sl] = oh.reshape(M, dh)

    attn = attn_scratch[...].astype(jnp.bfloat16)
    x = x + (jnp.dot(attn, w_out_ref[...], preferred_element_type=jnp.float32)
             + b_out_ref[...])                   # residual 1 (with out_proj)

    # -------------------------------- MLP branch ------------------------------
    y2 = _layernorm(x, ln2g_ref[...], ln2b_ref[...]).astype(jnp.bfloat16)
    FF = w_fc_ref.shape[1]
    ff_chunk = 512 if (FF > 512 and FF % 512 == 0) else FF
    mlp = jnp.zeros((M, D), jnp.float32)
    for c0 in range(0, FF, ff_chunk):            # static chunking of the 4D axis
        hci = (jnp.dot(y2, w_fc_ref[:, c0:c0 + ff_chunk],
                       preferred_element_type=jnp.float32)
               + b_fc_ref[:, c0:c0 + ff_chunk])
        hci = hci * jax.nn.sigmoid(1.702 * hci)  # QuickGELU (f32)
        mlp = mlp + jnp.dot(hci.astype(jnp.bfloat16),
                            w_proj_ref[c0:c0 + ff_chunk, :],
                            preferred_element_type=jnp.float32)
    x = x + mlp + b_proj_ref[...]                # residual 2
    o_ref[...] = x.reshape(TB, L, D).astype(o_ref.dtype)


def residual_block(x_nld, p, n_head):
    """x_nld: (N, L, D) batch-first tokens."""
    N, L, D = x_nld.shape
    TB = _batch_tile(N, L)
    M = TB * L
    FF = 4 * D

    kern = functools.partial(resblock_kernel, n_head=n_head)
    x_spec = pl.BlockSpec((TB, L, D), lambda i: (i, 0, 0))

    def full(r, c):                              # grid-invariant weight block
        return pl.BlockSpec((r, c), lambda i: (0, 0))

    in_specs = [
        x_spec,
        full(1, D), full(1, D),                  # ln1 gamma / beta
        full(D, 3 * D), full(1, 3 * D),          # packed in_proj W^T, bias
        full(D, D), full(1, D),                  # out_proj W^T, bias
        full(1, D), full(1, D),                  # ln2 gamma / beta
        full(D, FF), full(1, FF),                # c_fc W^T, bias
        full(FF, D), full(1, D),                 # c_proj W^T, bias
    ]

    return pl.pallas_call(
        kern,
        out_shape=jax.ShapeDtypeStruct((N, L, D), x_nld.dtype),
        grid=(N // TB,),
        in_specs=in_specs,
        out_specs=x_spec,
        scratch_shapes=[pltpu.VMEM((M, D), jnp.float32)],
        compiler_params=pltpu.CompilerParams(
            dimension_semantics=("parallel",),
            vmem_limit_bytes=_VMEM_LIMIT),
    )(x_nld,
      p["ln1_g"], p["ln1_b"],
      p["w_in"], p["b_in"], p["w_out"], p["b_out"],
      p["ln2_g"], p["ln2_b"],
      p["w_fc"], p["b_fc"], p["w_proj"], p["b_proj"])


# ----------------------- dense (residual_fc) kernel --------------------------

def dense_kernel(x_ref, w_ref, b_ref, o_ref):
    x = x_ref[...].astype(jnp.bfloat16)
    y = jnp.dot(x, w_ref[...], preferred_element_type=jnp.float32) + b_ref[...]
    o_ref[...] = y.astype(o_ref.dtype)


def dense(x2d, w, b):
    M, Cin = x2d.shape
    Cout = w.shape[1]
    TM = _row_tile(M)
    return pl.pallas_call(
        dense_kernel,
        out_shape=jax.ShapeDtypeStruct((M, Cout), jnp.float32),
        grid=(M // TM,),
        in_specs=[pl.BlockSpec((TM, Cin), lambda i: (i, 0)),
                  pl.BlockSpec((Cin, Cout), lambda i: (0, 0)),
                  pl.BlockSpec((1, Cout), lambda i: (0, 0))],
        out_specs=pl.BlockSpec((TM, Cout), lambda i: (i, 0)),
        compiler_params=pltpu.CompilerParams(
            dimension_semantics=("parallel",),
            vmem_limit_bytes=_VMEM_LIMIT),
    )(x2d, w, b)


# ------------------------------ ln_post kernel -------------------------------

def layernorm_kernel(x_ref, g_ref, b_ref, o_ref):
    o_ref[...] = _layernorm(x_ref[...], g_ref[...], b_ref[...]).astype(o_ref.dtype)


def layernorm_rows(x2d, g, b):
    M, D = x2d.shape
    TM = _row_tile(M)
    return pl.pallas_call(
        layernorm_kernel,
        out_shape=jax.ShapeDtypeStruct((M, D), x2d.dtype),
        grid=(M // TM,),
        in_specs=[pl.BlockSpec((TM, D), lambda i: (i, 0)),
                  pl.BlockSpec((1, D), lambda i: (0, 0)),
                  pl.BlockSpec((1, D), lambda i: (0, 0))],
        out_specs=pl.BlockSpec((TM, D), lambda i: (i, 0)),
        compiler_params=pltpu.CompilerParams(
            dimension_semantics=("parallel",),
            vmem_limit_bytes=_VMEM_LIMIT),
    )(x2d, g, b)


# ------------------------ PixelShuffle token re-order ------------------------

def pixel_shuffle_tokens(y, c_out, res, scale=2):
    """PSUpsamplerBlock's permute/reshape/PixelShuffle chain (pure data layout).

    y: (N, res*res, c_out*scale*scale), channel index = c*scale*scale + di*scale + dj.
    Returns (N, (res*scale)**2, c_out) with token (i*scale+di, j*scale+dj) row-major.
    """
    n = y.shape[0]
    y = y.reshape(n, res, res, c_out, scale, scale)
    y = jnp.transpose(y, (0, 1, 4, 2, 5, 3))
    return y.reshape(n, res * scale * res * scale, c_out)


# ----------------------------- full forward pass -----------------------------

def gaussian_upsampler_forward(x, params):
    """x: (N, L, C) batch-first tokens (GaussianUpsampler input layout).

    The PyTorch permutes to seq-first around each Transformer are pure layout and
    are elided; (N, L, D) stays the canonical activation layout throughout.
    """
    for st in params["stages"]:
        N, L, C = x.shape
        res = int(round(math.sqrt(L)))
        width = st["width"]
        # PSUpsamplerBlock.residual_fc (Pallas dense kernel) + PixelShuffle(2)
        y = dense(x.reshape(N * L, C), st["ups_w"], st["ups_b"])
        x = pixel_shuffle_tokens(y.reshape(N, L, 4 * width), width, res, 2)
        # Transformer(width, layers=2, heads=width//64)
        for blk in st["blocks"]:
            x = residual_block(x, blk, st["heads"])
    N, L, D = x.shape
    x = layernorm_rows(x.reshape(N * L, D),
                       params["ln_post_g"], params["ln_post_b"])
    return x.reshape(N, L, D)


# ----------------------- deterministic parameter init ------------------------

def init_block_params(key, d):
    ks = jax.random.split(key, 12)
    bf = jnp.bfloat16
    nrm = lambda k, shp: 0.02 * jax.random.normal(k, shp, jnp.float32)
    return {
        "ln1_g": 1.0 + 0.1 * jax.random.normal(ks[0], (1, d), jnp.float32),
        "ln1_b": 0.05 * jax.random.normal(ks[1], (1, d), jnp.float32),
        # all weights stored as (in, out) == torch W.T; matmul operands are bf16
        "w_in": nrm(ks[2], (d, 3 * d)).astype(bf),
        "b_in": nrm(ks[3], (1, 3 * d)),
        "w_out": nrm(ks[4], (d, d)).astype(bf),
        "b_out": nrm(ks[5], (1, d)),
        "ln2_g": 1.0 + 0.1 * jax.random.normal(ks[6], (1, d), jnp.float32),
        "ln2_b": 0.05 * jax.random.normal(ks[7], (1, d), jnp.float32),
        "w_fc": nrm(ks[8], (d, 4 * d)).astype(bf),
        "b_fc": nrm(ks[9], (1, 4 * d)),
        "w_proj": nrm(ks[10], (4 * d, d)).astype(bf),
        "b_proj": nrm(ks[11], (1, d)),
    }


def init_params(key, base_width, up_ratio, ch_decay=1, layers_per_stage=2):
    n_stages = int(math.log2(up_ratio))
    keys = jax.random.split(key, n_stages + 1)
    stages = []
    width = base_width
    for s_idx in range(n_stages):
        c_in = width
        width = max(width // ch_decay, 64)
        heads = width // 64
        width = heads * 64
        ku, kb, kblk = jax.random.split(keys[s_idx], 3)
        blocks = [init_block_params(k, width)
                  for k in jax.random.split(kblk, layers_per_stage)]
        stages.append({
            "width": width,
            "heads": heads,
            "ups_w": (0.02 * jax.random.normal(ku, (c_in, 4 * width),
                                               jnp.float32)).astype(jnp.bfloat16),
            "ups_b": 0.02 * jax.random.normal(kb, (1, 4 * width), jnp.float32),
            "blocks": blocks,
        })
    kg, kbb = jax.random.split(keys[-1])
    return {
        "stages": stages,
        "ln_post_g": 1.0 + 0.1 * jax.random.normal(kg, (1, width), jnp.float32),
        "ln_post_b": 0.05 * jax.random.normal(kbb, (1, width), jnp.float32),
    }


# --------------------------- pure-JAX reference -------------------------------

def ref_resblock(x, p, n_head):
    N, L, D = x.shape
    dh = D // n_head
    scale = 1.0 / math.sqrt(dh)
    y = _layernorm(x, p["ln1_g"], p["ln1_b"])
    qkv = _mm(y.reshape(N * L, D), p["w_in"]) + p["b_in"]
    q = qkv[:, :D].reshape(N, L, n_head, dh)
    k = qkv[:, D:2 * D].reshape(N, L, n_head, dh)
    v = qkv[:, 2 * D:].reshape(N, L, n_head, dh)
    s = jnp.einsum("nqhd,nkhd->nhqk",
                   q.astype(jnp.bfloat16), k.astype(jnp.bfloat16),
                   preferred_element_type=jnp.float32) * scale
    a = jax.nn.softmax(s, axis=-1)
    o = jnp.einsum("nhqk,nkhd->nqhd",
                   a.astype(jnp.bfloat16), v.astype(jnp.bfloat16),
                   preferred_element_type=jnp.float32).reshape(N * L, D)
    x = x + (_mm(o, p["w_out"]) + p["b_out"]).reshape(N, L, D)
    y2 = _layernorm(x, p["ln2_g"], p["ln2_b"]).reshape(N * L, D)
    h1 = _mm(y2, p["w_fc"]) + p["b_fc"]
    h1 = h1 * jax.nn.sigmoid(1.702 * h1)
    m = _mm(h1, p["w_proj"]) + p["b_proj"]
    return x + m.reshape(N, L, D)


def ref_forward(x, params):
    for st in params["stages"]:
        N, L, C = x.shape
        res = int(round(math.sqrt(L)))
        width = st["width"]
        y = _mm(x.reshape(N * L, C), st["ups_w"]) + st["ups_b"]
        x = pixel_shuffle_tokens(y.reshape(N, L, 4 * width), width, res, 2)
        for blk in st["blocks"]:
            x = ref_resblock(x, blk, st["heads"])
    N, L, D = x.shape
    x = _layernorm(x.reshape(N * L, D), params["ln_post_g"], params["ln_post_b"])
    return x.reshape(N, L, D)


# ----------------------------------- main -------------------------------------

if __name__ == "__main__":
    # GaussianUpsampler(width=128, up_ratio=4): 2 stages, each PSUpsampler + 2 resblocks,
    # heads = width // 64 = 2 (head_dim = 64).  Input tokens: 4x4 grid, batch 2.
    BATCH, RES0, BASE_WIDTH, UP_RATIO = 2, 4, 128, 4

    key = jax.random.PRNGKey(0)
    kx, kp = jax.random.split(key)
    x = jax.random.normal(kx, (BATCH, RES0 * RES0, BASE_WIDTH), jnp.float32)
    params = init_params(kp, BASE_WIDTH, UP_RATIO)

    out = gaussian_upsampler_forward(x, params)
    out = jax.block_until_ready(out)

    ref = ref_forward(x, params)
    expected_shape = (BATCH, RES0 * RES0 * UP_RATIO * UP_RATIO, 128)
    assert out.shape == expected_shape, out.shape
    assert ref.shape == expected_shape, ref.shape
    err = float(jnp.max(jnp.abs(out - ref)))
    # bf16 matmul operands + approx-reciprocal softmax => loose-but-meaningful bound
    assert err < 2e-2, err

    print("KERNEL_OK")
</pallas_src>

<mosaic_0001>
module attributes {stable_mosaic.version = 11 : i64} {
  func.func @dense_kernel(%arg0: i32, %arg1: memref<32x128xf32, #tpu.memory_space<vmem>>, %arg2: memref<128x512xbf16, #tpu.memory_space<vmem>>, %arg3: memref<1x512xf32, #tpu.memory_space<vmem>>, %arg4: memref<32x512xf32, #tpu.memory_space<vmem>>) attributes {dimension_semantics = [#tpu.dimension_semantics<parallel>], iteration_bounds = array<i64: 1>, scalar_prefetch = 0 : i64, scratch_operands = 0 : i64, tpu.core_type = #tpu.core_type<tc>, window_params = [{transform_indices = @transform_0, window_bounds = array<i64: 32, 128>}, {pipeline_mode = #tpu.pipeline_mode<synchronous>, transform_indices = @transform_1, window_bounds = array<i64: 128, 512>}, {pipeline_mode = #tpu.pipeline_mode<synchronous>, transform_indices = @transform_2, window_bounds = array<i64: 1, 512>}, {transform_indices = @transform_3, window_bounds = array<i64: 32, 512>}]} {
    %c0 = arith.constant 0 : index
    %c0_0 = arith.constant 0 : index
    %0 = vector.load %arg1[%c0, %c0_0] : memref<32x128xf32, #tpu.memory_space<vmem>>, vector<32x128xf32>
    %1 = arith.truncf %0 : vector<32x128xf32> to vector<32x128xbf16>
    %c0_1 = arith.constant 0 : index
    %c0_2 = arith.constant 0 : index
    %2 = vector.load %arg2[%c0_1, %c0_2] : memref<128x512xbf16, #tpu.memory_space<vmem>>, vector<128x512xbf16>
    %cst = arith.constant dense<0.000000e+00> : vector<32x512xf32>
    %3 = tpu.matmul %1, %2, %cst {dimension_numbers = #tpu.dot_dimension_numbers<[1], [0], [0], [1], [0, 0, 1, 1], [], []>} : vector<32x128xbf16>, vector<128x512xbf16>, vector<32x512xf32> -> vector<32x512xf32>
    %c0_3 = arith.constant 0 : index
    %c0_4 = arith.constant 0 : index
    %4 = vector.load %arg3[%c0_3, %c0_4] : memref<1x512xf32, #tpu.memory_space<vmem>>, vector<1x512xf32>
    %5 = vector.broadcast %4 : vector<1x512xf32> to vector<32x512xf32>
    %6 = arith.addf %3, %5 : vector<32x512xf32>
    %c0_5 = arith.constant 0 : index
    %c0_6 = arith.constant 0 : index
    %7 = vector.load %arg4[%c0_5, %c0_6] : memref<32x512xf32, #tpu.memory_space<vmem>>, vector<32x512xf32>
    tpu.vector_store %arg4[%c0_5, %c0_6], %6 {strides = array<i32>} : memref<32x512xf32, #tpu.memory_space<vmem>>, vector<32x512xf32>,
    return
  }
  func.func @transform_0(%arg0: i32) -> (i32, i32) {
    %c0_i32 = arith.constant 0 : i32
    %c0_i32_0 = arith.constant 0 : i32
    return %arg0, %c0_i32 : i32, i32
  }
  func.func @transform_1(%arg0: i32) -> (i32, i32) {
    %c0_i32 = arith.constant 0 : i32
    %c0_i32_0 = arith.constant 0 : i32
    %c0_i32_1 = arith.constant 0 : i32
    return %c0_i32, %c0_i32_0 : i32, i32
  }
  func.func @transform_2(%arg0: i32) -> (i32, i32) {
    %c0_i32 = arith.constant 0 : i32
    %c0_i32_0 = arith.constant 0 : i32
    %c0_i32_1 = arith.constant 0 : i32
    return %c0_i32, %c0_i32_0 : i32, i32
  }
  func.func @transform_3(%arg0: i32) -> (i32, i32) {
    %c0_i32 = arith.constant 0 : i32
    %c0_i32_0 = arith.constant 0 : i32
    return %arg0, %c0_i32 : i32, i32
  }
}

</mosaic_0001>

<llo_original>
// kernel: tpu_custom_call.1
$region0: #{tpu_custom_call.1}
  #allocation0 [shape = 'u32[]', space=smem, size = 0x4, offset = 0x4, fixed_abs, tag = 'smem constant byte address 0x4 - core index']
  #allocation1 [shape = 'u32[72,128]{1,0:T(1,128)}', space=vmem, size = 0x9000, scoped, tag = 'internal scratch']
  %s0 = inlined_call_operand.hbm [shape: f32[32,128], index: 0, kind: input, shape index: {}]
  %s1 = inlined_call_operand.hbm [shape: bf16[128,512], index: 1, kind: input, shape index: {}]
  %s2 = inlined_call_operand.hbm [shape: f32[1,512], index: 2, kind: input, shape index: {}]
  %s3 = inlined_call_operand.hbm [shape: f32[32,512], index: 3, kind: output, shape index: {}]
  %s4 = sld [smem:[#allocation0]]
  $region34: #{tpu_custom_call.1} parent=0
    _
  %s6 = ssub.s32 1, %s4
  %s7 = scalar_select 0, %s6, %s4
  $region1: #{tpu_custom_call.1} parent=0
    #allocation2 [shape = 'u8[16384]{0}', space=vmem, size = 0x4000, scoped, tag = 'input window, operand 0, single buffered']
    #allocation3 [shape = 's32[1]{0}', space=sflag, size = 0x4, scoped, tag = 'scoped memory for tpu_custom_call.1']
    #allocation4 [shape = 's32[1]{0}', space=sflag, size = 0x4, scoped, tag = 'scoped memory for tpu_custom_call.1']
    #allocation5 [shape = 'u8[131072]{0}', space=vmem, size = 0x20000, scoped, tag = 'input window, operand 1, single buffered']
    #allocation6 [shape = 's32[1]{0}', space=sflag, size = 0x4, scoped, tag = 'scoped memory for tpu_custom_call.1']
    #allocation7 [shape = 'u8[2048]{0}', space=vmem, size = 0x800, scoped, tag = 'input window, operand 2, single buffered']
    #allocation8 [shape = 'u8[65536]{0}', space=vmem, size = 0x10000, scoped, tag = 'output window, operand 0, single buffered']
    %8 = vsyncpa [#allocation3], 0
    %9 = vsyncpa [#allocation6], 0
    %10 = vsyncpa [#allocation4], 0
    // Predicated region
    $region2: #{tpu_custom_call.1} parent=1 // pred_check
      _
    $region3: #{tpu_custom_call.1} parent=1 // pred_check_branch
      %12 = sbr.rel (0) target = $region5
    $region4: #{tpu_custom_call.1} parent=1 // pred_region
      %14 = vsyncadd [#allocation3], 0
      %s15 = sshll.u32 %s0, 4
      %s16 = int_to_ptr.hbm [resolvable:$true] %s15
      %s17 = sshll.u32 [#allocation2], 4
      %s18 = int_to_ptr.vmem [resolvable:$true] %s17
      %23 = dma.hbm_to_vmem [thread:$0]  %s16, 512, %s18, [#allocation3], 128, 128, 8
    $region5: #{tpu_custom_call.1} parent=1 // pred_fallthru
      _
    // Predicated region
    $region6: #{tpu_custom_call.1} parent=1 // pred_check
      _
    $region7: #{tpu_custom_call.1} parent=1 // pred_check_branch
      %25 = sbr.rel (0) target = $region9
    $region8: #{tpu_custom_call.1} parent=1 // pred_region
      %27 = vsyncadd [#allocation6], 0
      %s28 = sshll.u32 %s1, 4
      %s29 = int_to_ptr.hbm [resolvable:$true] %s28
      %s30 = sshll.u32 [#allocation5], 4
      %s31 = int_to_ptr.vmem [resolvable:$true] %s30
      %36 = dma.hbm_to_vmem [thread:$0]  %s29, 4096, %s31, [#allocation6], 256, 256, 16
    $region9: #{tpu_custom_call.1} parent=1 // pred_fallthru
      _
    // Predicated region
    $region10: #{tpu_custom_call.1} parent=1 // pred_check
      _
    $region11: #{tpu_custom_call.1} parent=1 // pred_check_branch
      %38 = sbr.rel (0) target = $region13
    $region12: #{tpu_custom_call.1} parent=1 // pred_region
      %40 = vsyncadd [#allocation6], 0
      %s42 = sshll.u32 %s2, 4
      %s43 = int_to_ptr.hbm [resolvable:$true] %s42
      %s44 = sshll.u32 [#allocation7], 4
      %s45 = int_to_ptr.vmem [resolvable:$true] %s44
      %47 = dma.hbm_to_vmem [thread:$0]  %s43, 64, %s45, [#allocation6]
    $region13: #{tpu_custom_call.1} parent=1 // pred_fallthru
      _
    // Predicated region
    $region14: #{tpu_custom_call.1} parent=1 // pred_check
      _
    $region15: #{tpu_custom_call.1} parent=1 // pred_check_branch
      %49 = sbr.rel (0) target = $region17
    $region16: #{tpu_custom_call.1} parent=1 // pred_region
      %51 = dma.done [#allocation3], 512
    $region17: #{tpu_custom_call.1} parent=1 // pred_fallthru
      _
    // Predicated region
    $region18: #{tpu_custom_call.1} parent=1 // pred_check
      _
    $region19: #{tpu_custom_call.1} parent=1 // pred_check_branch
      %53 = sbr.rel (0) target = $region21
    $region20: #{tpu_custom_call.1} parent=1 // pred_region
      %55 = dma.done [#allocation6], 4096
    $region21: #{tpu_custom_call.1} parent=1 // pred_fallthru
      _
    // Predicated region
    $region22: #{tpu_custom_call.1} parent=1 // pred_check
      _
    $region23: #{tpu_custom_call.1} parent=1 // pred_check_branch
      %57 = sbr.rel (0) target = $region25
    $region24: #{tpu_custom_call.1} parent=1 // pred_region
      %59 = dma.done [#allocation6], 64
    $region25: #{tpu_custom_call.1} parent=1 // pred_fallthru
      _
    %v60 = vld [vmem:[#allocation2] sm:$0xff]
    %v61 = vld [vmem:[#allocation2 + $0x8] sm:$0xff]
    %v62 = vld [vmem:[#allocation2 + $0x10] sm:$0xff]
    %v63 = vld [vmem:[#allocation2 + $0x18] sm:$0xff]
    %v64 = vpack.c.bf16 %v61, %v60
    %v65 = vpack.c.bf16 %v63, %v62
    %v66 = vld [vmem:[#allocation5] sm:$0xff]
    %v67 = vld [vmem:[#allocation5 + $0x8] sm:$0xff]
    %v68 = vld [vmem:[#allocation5 + $0x10] sm:$0xff]
    %v69 = vld [vmem:[#allocation5 + $0x18] sm:$0xff]
    %v70 = vld [vmem:[#allocation5 + $0x20] sm:$0xff]
    %v71 = vld [vmem:[#allocation5 + $0x28] sm:$0xff]
    %v72 = vld [vmem:[#allocation5 + $0x30] sm:$0xff]
    %v73 = vld [vmem:[#allocation5 + $0x38] sm:$0xff]
    %v74 = vld [vmem:[#allocation5 + $0x40] sm:$0xff]
    %v75 = vld [vmem:[#allocation5 + $0x48] sm:$0xff]
    %v76 = vld [vmem:[#allocation5 + $0x50] sm:$0xff]
    %v77 = vld [vmem:[#allocation5 + $0x58] sm:$0xff]
    %v78 = vld [vmem:[#allocation5 + $0x60] sm:$0xff]
    %v79 = vld [vmem:[#allocation5 + $0x68] sm:$0xff]
    %v80 = vld [vmem:[#allocation5 + $0x70] sm:$0xff]
    %v81 = vld [vmem:[#allocation5 + $0x78] sm:$0xff]
    %v82 = vld [vmem:[#allocation5 + $0x80] sm:$0xff]
    %v83 = vld [vmem:[#allocation5 + $0x88] sm:$0xff]
    %v84 = vld [vmem:[#allocation5 + $0x90] sm:$0xff]
    %v85 = vld [vmem:[#allocation5 + $0x98] sm:$0xff]
    %v86 = vld [vmem:[#allocation5 + $0xa0] sm:$0xff]
    %v87 = vld [vmem:[#allocation5 + $0xa8] sm:$0xff]
    %v88 = vld [vmem:[#allocation5 + $0xb0] sm:$0xff]
    %v89 = vld [vmem:[#allocation5 + $0xb8] sm:$0xff]
    %v90 = vld [vmem:[#allocation5 + $0xc0] sm:$0xff]
    %v91 = vld [vmem:[#allocation5 + $0xc8] sm:$0xff]
    %v92 = vld [vmem:[#allocation5 + $0xd0] sm:$0xff]
    %v93 = vld [vmem:[#allocation5 + $0xd8] sm:$0xff]
    %v94 = vld [vmem:[#allocation5 + $0xe0] sm:$0xff]
    %v95 = vld [vmem:[#allocation5 + $0xe8] sm:$0xff]
    %v96 = vld [vmem:[#allocation5 + $0xf0] sm:$0xff]
    %v97 = vld [vmem:[#allocation5 + $0xf8] sm:$0xff]
    %v98 = vld [vmem:[#allocation7] sm:$0xf]
    %v100 = vperm.slane %v98, 0
    %v101 = vperm.slane %v98, 1
    %v102 = vperm.slane %v98, 2
    %v103 = vperm.slane %v98, 3
    %v140 = vunpack.c.l.b16 %v66
    %v141 = vunpack.c.h.b16 %v66
    %v142 = vunpack.c.l.b16 %v67
    %v143 = vunpack.c.h.b16 %v67
    %v144 = vunpack.c.l.b16 %v68
    %v145 = vunpack.c.h.b16 %v68
    %v146 = vunpack.c.l.b16 %v69
    %v147 = vunpack.c.h.b16 %v69
    %v148 = vunpack.c.l.b16 %v70
    %v149 = vunpack.c.h.b16 %v70
    %v150 = vunpack.c.l.b16 %v71
    %v151 = vunpack.c.h.b16 %v71
    %v152 = vunpack.c.l.b16 %v72
    %v153 = vunpack.c.h.b16 %v72
    %v154 = vunpack.c.l.b16 %v73
    %v155 = vunpack.c.h.b16 %v73
    %v156 = vunpack.c.l.b16 %v74
    %v157 = vunpack.c.h.b16 %v74
    %v158 = vunpack.c.l.b16 %v75
    %v159 = vunpack.c.h.b16 %v75
    %v160 = vunpack.c.l.b16 %v76
    %v161 = vunpack.c.h.b16 %v76
    %v162 = vunpack.c.l.b16 %v77
    %v163 = vunpack.c.h.b16 %v77
    %v164 = vunpack.c.l.b16 %v78
    %v165 = vunpack.c.h.b16 %v78
    %v166 = vunpack.c.l.b16 %v79
    %v167 = vunpack.c.h.b16 %v79
    %v168 = vunpack.c.l.b16 %v80
    %v169 = vunpack.c.h.b16 %v80
    %v170 = vunpack.c.l.b16 %v81
    %v171 = vunpack.c.h.b16 %v81
    %v172 = vunpack.c.l.b16 %v82
    %v173 = vunpack.c.h.b16 %v82
    %v174 = vunpack.c.l.b16 %v83
    %v175 = vunpack.c.h.b16 %v83
    %v176 = vunpack.c.l.b16 %v84
    %v177 = vunpack.c.h.b16 %v84
    %v178 = vunpack.c.l.b16 %v85
    %v179 = vunpack.c.h.b16 %v85
    %v180 = vunpack.c.l.b16 %v86
    %v181 = vunpack.c.h.b16 %v86
    %v182 = vunpack.c.l.b16 %v87
    %v183 = vunpack.c.h.b16 %v87
    %v184 = vunpack.c.l.b16 %v88
    %v185 = vunpack.c.h.b16 %v88
    %v186 = vunpack.c.l.b16 %v89
    %v187 = vunpack.c.h.b16 %v89
    %v188 = vunpack.c.l.b16 %v90
    %v189 = vunpack.c.h.b16 %v90
    %v190 = vunpack.c.l.b16 %v91
    %v191 = vunpack.c.h.b16 %v91
    %v192 = vunpack.c.l.b16 %v92
    %v193 = vunpack.c.h.b16 %v92
    %v194 = vunpack.c.l.b16 %v93
    %v195 = vunpack.c.h.b16 %v93
    %v196 = vunpack.c.l.b16 %v94
    %v197 = vunpack.c.h.b16 %v94
    %v198 = vunpack.c.l.b16 %v95
    %v199 = vunpack.c.h.b16 %v95
    %v200 = vunpack.c.l.b16 %v96
    %v201 = vunpack.c.h.b16 %v96
    %v202 = vunpack.c.l.b16 %v97
    %v203 = vunpack.c.h.b16 %v97
    %v204 = vpack.c.b16 %v144, %v140
    %v205 = vpack.c.b16 %v145, %v141
    %v206 = vpack.c.b16 %v146, %v142
    %v207 = vpack.c.b16 %v147, %v143
    %v208 = vpack.c.b16 %v152, %v148
    %v209 = vpack.c.b16 %v153, %v149
    %v210 = vpack.c.b16 %v154, %v150
    %v211 = vpack.c.b16 %v155, %v151
    %v212 = vpack.c.b16 %v160, %v156
    %v213 = vpack.c.b16 %v161, %v157
    %v214 = vpack.c.b16 %v162, %v158
    %v215 = vpack.c.b16 %v163, %v159
    %v216 = vpack.c.b16 %v168, %v164
    %v217 = vpack.c.b16 %v169, %v165
    %v218 = vpack.c.b16 %v170, %v166
    %v219 = vpack.c.b16 %v171, %v167
    %v220 = vpack.c.b16 %v176, %v172
    %v221 = vpack.c.b16 %v177, %v173
    %v222 = vpack.c.b16 %v178, %v174
    %v223 = vpack.c.b16 %v179, %v175
    %v224 = vpack.c.b16 %v184, %v180
    %v225 = vpack.c.b16 %v185, %v181
    %v226 = vpack.c.b16 %v186, %v182
    %v227 = vpack.c.b16 %v187, %v183
    %v228 = vpack.c.b16 %v192, %v188
    %v229 = vpack.c.b16 %v193, %v189
    %v230 = vpack.c.b16 %v194, %v190
    %v231 = vpack.c.b16 %v195, %v191
    %v232 = vpack.c.b16 %v200, %v196
    %v233 = vpack.c.b16 %v201, %v197
    %v234 = vpack.c.b16 %v202, %v198
    %v235 = vpack.c.b16 %v203, %v199
    %268 = vmatpush.bf16.msra.mxu0 %v232
    %269 = vmatpush.bf16.msra.mxu0 %v228
    %270 = vmatpush.bf16.msra.mxu0 %v224
    %271 = vmatpush.bf16.msra.mxu0 %v220
    %272 = vmatpush.bf16.msra.mxu0 %v216
    %273 = vmatpush.bf16.msra.mxu0 %v212
    %274 = vmatpush.bf16.msra.mxu0 %v208
    %275 = vmatpush.bf16.msra.mxu0 %v204
    %276 = vmatmul.bf16.gmra.mxu0 %v64
    %v277 = vpop.f32.mrf.mxu0
    %v278 = vadd.f32 %v100, %v277
    %v279 = vpop.f32.mrf.mxu0
    %v280 = vadd.f32 %v100, %v279
    %281 = vmatmul.bf16.gmra.mxu0 %v65
    %v282 = vpop.f32.mrf.mxu0
    %v283 = vadd.f32 %v100, %v282
    %v284 = vpop.f32.mrf.mxu0
    %v285 = vadd.f32 %v100, %v284
    %286 = vdwg.mxu0
    %287 = vmatpush.bf16.msra.mxu0 %v233
    %288 = vmatpush.bf16.msra.mxu0 %v229
    %289 = vmatpush.bf16.msra.mxu0 %v225
    %290 = vmatpush.bf16.msra.mxu0 %v221
    %291 = vmatpush.bf16.msra.mxu0 %v217
    %292 = vmatpush.bf16.msra.mxu0 %v213
    %293 = vmatpush.bf16.msra.mxu0 %v209
    %294 = vmatpush.bf16.msra.mxu0 %v205
    %295 = vmatmul.bf16.gmra.mxu0 %v64
    %v296 = vpop.f32.mrf.mxu0
    %v297 = vadd.f32 %v101, %v296
    %v298 = vpop.f32.mrf.mxu0
    %v299 = vadd.f32 %v101, %v298
    %300 = vmatmul.bf16.gmra.mxu0 %v65
    %v301 = vpop.f32.mrf.mxu0
    %v302 = vadd.f32 %v101, %v301
    %v303 = vpop.f32.mrf.mxu0
    %v304 = vadd.f32 %v101, %v303
    %305 = vdwg.mxu0
    %306 = vmatpush.bf16.msra.mxu0 %v234
    %307 = vmatpush.bf16.msra.mxu0 %v230
    %308 = vmatpush.bf16.msra.mxu0 %v226
    %309 = vmatpush.bf16.msra.mxu0 %v222
    %310 = vmatpush.bf16.msra.mxu0 %v218
    %311 = vmatpush.bf16.msra.mxu0 %v214
    %312 = vmatpush.bf16.msra.mxu0 %v210
    %313 = vmatpush.bf16.msra.mxu0 %v206
    %314 = vmatmul.bf16.gmra.mxu0 %v64
    %v315 = vpop.f32.mrf.mxu0
    %v316 = vadd.f32 %v102, %v315
    %v317 = vpop.f32.mrf.mxu0
    %v318 = vadd.f32 %v102, %v317
    %319 = vmatmul.bf16.gmra.mxu0 %v65
    %v320 = vpop.f32.mrf.mxu0
    %v321 = vadd.f32 %v102, %v320
    %v322 = vpop.f32.mrf.mxu0
    %v323 = vadd.f32 %v102, %v322
    %324 = vdwg.mxu0
    %325 = vmatpush.bf16.msra.mxu0 %v235
    %326 = vmatpush.bf16.msra.mxu0 %v231
    %327 = vmatpush.bf16.msra.mxu0 %v227
    %328 = vmatpush.bf16.msra.mxu0 %v223
    %329 = vmatpush.bf16.msra.mxu0 %v219
    %330 = vmatpush.bf16.msra.mxu0 %v215
    %331 = vmatpush.bf16.msra.mxu0 %v211
    %332 = vmatpush.bf16.msra.mxu0 %v207
    %333 = vmatmul.bf16.gmra.mxu0 %v64
    %v334 = vpop.f32.mrf.mxu0
    %v335 = vadd.f32 %v103, %v334
    %v336 = vpop.f32.mrf.mxu0
    %v337 = vadd.f32 %v103, %v336
    %338 = vmatmul.bf16.gmra.mxu0 %v65
    %v339 = vpop.f32.mrf.mxu0
    %v340 = vadd.f32 %v103, %v339
    %v341 = vpop.f32.mrf.mxu0
    %v342 = vadd.f32 %v103, %v341
    %343 = vdwg.mxu0
    %344 = vst [vmem:[#allocation8] sm:$0xff] %v278
    %345 = vst [vmem:[#allocation8 + $0x8] sm:$0xff] %v297
    %346 = vst [vmem:[#allocation8 + $0x10] sm:$0xff] %v316
    %347 = vst [vmem:[#allocation8 + $0x18] sm:$0xff] %v335
    %348 = vst [vmem:[#allocation8 + $0x20] sm:$0xff] %v280
    %349 = vst [vmem:[#allocation8 + $0x28] sm:$0xff] %v299
    %350 = vst [vmem:[#allocation8 + $0x30] sm:$0xff] %v318
    %351 = vst [vmem:[#allocation8 + $0x38] sm:$0xff] %v337
    %352 = vst [vmem:[#allocation8 + $0x40] sm:$0xff] %v283
    %353 = vst [vmem:[#allocation8 + $0x48] sm:$0xff] %v302
    %354 = vst [vmem:[#allocation8 + $0x50] sm:$0xff] %v321
    %355 = vst [vmem:[#allocation8 + $0x58] sm:$0xff] %v340
    %356 = vst [vmem:[#allocation8 + $0x60] sm:$0xff] %v285
    %357 = vst [vmem:[#allocation8 + $0x68] sm:$0xff] %v304
    %358 = vst [vmem:[#allocation8 + $0x70] sm:$0xff] %v323
    %359 = vst [vmem:[#allocation8 + $0x78] sm:$0xff] %v342
    // Predicated region
    $region26: #{tpu_custom_call.1} parent=1 // pred_check
      _
    $region27: #{tpu_custom_call.1} parent=1 // pred_check_branch
      %361 = sbr.rel (0) target = $region29
    $region28: #{tpu_custom_call.1} parent=1 // pred_region
      %363 = vsyncadd [#allocation4], 0
      %s364 = sshll.u32 [#allocation8], 4
      %s365 = int_to_ptr.vmem [resolvable:$true] %s364
      %s366 = sshll.u32 %s3, 4
      %s367 = int_to_ptr.hbm [resolvable:$true] %s366
      %372 = dma.vmem_to_hbm [thread:$0]  %s365, 2048, %s367, [#allocation4], 512, 512, 32
    $region29: #{tpu_custom_call.1} parent=1 // pred_fallthru
      _
    // Predicated region
    $region30: #{tpu_custom_call.1} parent=1 // pred_check
      _
    $region31: #{tpu_custom_call.1} parent=1 // pred_check_branch
      %374 = sbr.rel (0) target = $region33
    $region32: #{tpu_custom_call.1} parent=1 // pred_region
      %376 = dma.done [#allocation4], 2048
    $region33: #{tpu_custom_call.1} parent=1 // pred_fallthru
      _
    %377 = vsyncpa [#allocation3], 1
    %378 = vsyncpa [#allocation6], 1
    %379 = vsyncpa [#allocation4], 1

</llo_original>
